<compile_context>
chip_gen: v7x
topology: tpu7x:2x2x1
jax: 0.10.0
libtpu: 0.0.40
codegen_flags: <defaults>
</compile_context>

<pallas_src>
import math

import jax
import jax.numpy as jnp
from jax.experimental import pallas as pl
from jax.experimental.pallas import tpu as pltpu


def _round_up(x, m):
    return ((x + m - 1) // m) * m


def _cdiv(a, b):
    return (a + b - 1) // b


# ---------------------------------------------------------------------------
# Kernel
# ---------------------------------------------------------------------------
def _linear_pol_kernel(wT_ref, w_polT_ref, xT_ref, espT_ref, oT_ref):
    # Main Linear: oT[G, tn] = wT[G, Kp] @ xT[Kp, tn]  (single MXU matmul,
    # f32 accumulation, lane-dense store: nodes on the 128-lane axis).
    acc = jnp.dot(wT_ref[...], xT_ref[...], preferred_element_type=jnp.float32)
    # Linear_pol: rank-1 esp term as a VPU broadcast-FMA, kept in f32.
    # The VALU slot has huge slack next to the single small vmatmul, so this
    # is effectively free and avoids a concatenate pass over x in HBM.
    acc = acc + w_polT_ref[...] * espT_ref[...]        # [G,1]*[1,tn] -> [G,tn]
    oT_ref[...] = acc.astype(oT_ref.dtype)


# ---------------------------------------------------------------------------
# VMEM bookkeeping
# ---------------------------------------------------------------------------
def _vmem_footprint_bytes(tile, kp, g, in_itemsize, out_itemsize, x_buffers):
    return (x_buffers * tile * kp * in_itemsize        # xT tiles
            + 2 * tile * g * out_itemsize              # oT tiles (double buffered)
            + 2 * tile * 4                             # espT tiles (f32)
            + 2 * g * kp * in_itemsize                 # resident wT (counted 2x)
            + 2 * g * 4)                               # resident w_pol (f32)


def _default_vmem_limit(tile, kp, g, in_itemsize, out_itemsize, x_buffers):
    fp = _vmem_footprint_bytes(tile, kp, g, in_itemsize, out_itemsize, x_buffers)
    # 2x headroom for compiler-internal scratch; clamp so it is safe on every
    # generation (v7x: 64 MiB physical per TensorCore).
    return int(min(48 << 20, max(8 << 20, 2 * fp)))


def _vmem_budget():
    cap = 64 << 20  # most conservative physical VMEM (v7x, per TensorCore)
    try:
        cap = int(pltpu.get_tpu_info().vmem_capacity_bytes)
    except Exception:
        pass
    # Stay well under physical VMEM.  The kernel passes an explicit
    # vmem_limit_bytes, so the per-chip default scoped limit (16 MiB on v5e)
    # is not the binding constraint.
    return int(min(20 << 20, cap // 3))


def _num_tensorcores():
    # v7x exposes 2 TensorCores per chip (megacore); v5e/v6e have 1.
    try:
        kind = jax.devices()[0].device_kind.lower()
    except Exception:
        return 1
    return 2 if "7" in kind else 1


# ---------------------------------------------------------------------------
# Tile selection (per-step HBM volume first, grid depth second)
# ---------------------------------------------------------------------------
def _pick_node_tile(n, kp, g, in_itemsize, out_itemsize, *, lane=128,
                    max_tile=8192, min_steps=4, min_tile_bytes=1 << 20,
                    vmem_budget=20 << 20, x_buffers=3):
    np_min = _round_up(max(n, 1), lane)
    max_tile = max(lane, (min(max_tile, np_min) // lane) * lane)

    # Per-step HBM volume floor: a tile must carry enough bytes that the
    # ~0.35 us per-grid-step pipeline overhead is amortized.
    bytes_per_node = kp * in_itemsize + g * out_itemsize + 4
    min_tile = min(max_tile,
                   _round_up(_cdiv(min_tile_bytes, bytes_per_node), lane))

    # Fewest grid steps allowed by max_tile ...
    steps = _cdiv(np_min, max_tile)
    # ... then add steps for pipeline depth / megacore sharding, but never at
    # the cost of dropping per-step traffic below the floor.
    while steps < min_steps:
        cand = _round_up(_cdiv(np_min, steps + 1), lane)
        if cand < min_tile:
            break
        steps += 1
    tile = _round_up(_cdiv(np_min, steps), lane)

    # VMEM guard (matters only if F/G grow): shrink until the footprint fits.
    while tile > lane and _vmem_footprint_bytes(
            tile, kp, g, in_itemsize, out_itemsize, x_buffers) > vmem_budget:
        tile -= lane

    n_pad = _round_up(np_min, tile)
    return tile, n_pad


# ---------------------------------------------------------------------------
# Lane-dense entry point
# ---------------------------------------------------------------------------
def _x_block_spec(kp, tile, buffers):
    idx = lambda i: (0, i)
    if buffers > 2 and hasattr(pl, "Buffered"):
        try:
            return pl.BlockSpec((kp, tile), idx,
                                pipeline_mode=pl.Buffered(buffers))
        except TypeError:
            pass
    return pl.BlockSpec((kp, tile), idx)


def atomwise_linear_pol_lane_dense(wT, w_polT, xT, espT, *, node_tile,
                                   out_dtype, x_buffers=3,
                                   vmem_limit_bytes=None):
    """Lane-dense entry point.

    wT:     [G, Kp]  transposed main-Linear weights (compute dtype).
    w_polT: [G, 1]   Linear_pol weights (f32).
    xT:     [Kp, Np] node features, nodes on the lane (last) axis; Np must be
                     a multiple of node_tile (itself a multiple of 128).
    espT:   [1, Np]  electrostatic potential per node (f32).
    Returns oT: [G, Np] in out_dtype.
    """
    G, Kp = wT.shape
    Kp2, Np = xT.shape
    assert Kp2 == Kp
    assert w_polT.shape == (G, 1)
    assert espT.shape == (1, Np)
    assert node_tile % 128 == 0 and Np % node_tile == 0

    in_itemsize = jnp.dtype(xT.dtype).itemsize
    out_itemsize = jnp.dtype(out_dtype).itemsize
    if vmem_limit_bytes is None:
        vmem_limit_bytes = _default_vmem_limit(
            node_tile, Kp, G, in_itemsize, out_itemsize, x_buffers)

    grid = (Np // node_tile,)

    def build(buffers):
        return pl.pallas_call(
            _linear_pol_kernel,
            out_shape=jax.ShapeDtypeStruct((G, Np), out_dtype),
            grid_spec=pltpu.PrefetchScalarGridSpec(
                num_scalar_prefetch=0,
                grid=grid,
                in_specs=[
                    # Full weight matrices, resident in VMEM across all steps.
                    pl.BlockSpec((G, Kp), lambda i: (0, 0)),
                    pl.BlockSpec((G, 1), lambda i: (0, 0)),
                    # One node-feature tile: features on sublanes, nodes on lanes.
                    _x_block_spec(Kp, node_tile, buffers),
                    # esp tile (f32), lane-dense.
                    pl.BlockSpec((1, node_tile), lambda i: (0, i)),
                ],
                # Lane-dense output stores: last dim is node_tile (>= 128).
                out_specs=pl.BlockSpec((G, node_tile), lambda i: (0, i)),
            ),
            compiler_params=pltpu.CompilerParams(
                dimension_semantics=("parallel",),
                vmem_limit_bytes=int(vmem_limit_bytes),
            ),
        )

    if x_buffers > 2:
        try:
            return build(x_buffers)(wT, w_polT, xT, espT)
        except Exception:
            # Triple-buffering unsupported on this jax/libtpu combination:
            # fall back to the default double-buffered pipeline.
            pass
    return build(2)(wT, w_polT, xT, espT)


# ---------------------------------------------------------------------------
# Module-layout wrapper
# ---------------------------------------------------------------------------
def atomwise_linear_pol(x, esp, w, w_pol, *, max_node_tile=8192,
                        compute_dtype=jnp.bfloat16, out_dtype=None,
                        x_buffers=3):
    """out[N, G] = x[N, F] @ w[F, G] + esp[N, 1] @ w_pol[1, G].

    Folds the forward of AtomwiseLinear_pol (linear(node_features) +
    linear_pol(esp)) into one lane-dense Pallas kernel.  Only the dominant x
    stream is cast to compute_dtype (bf16 default, f32 MXU accumulation); the
    esp / w_pol rank-1 term stays f32.  The transposes/pads here are layout
    plumbing -- callers that keep node-on-lanes activations end-to-end should
    use atomwise_linear_pol_lane_dense and avoid them.
    """
    N, F = x.shape
    G = w.shape[1]
    out_dtype = jnp.dtype(out_dtype) if out_dtype is not None else jnp.dtype(x.dtype)
    dt = jnp.dtype(compute_dtype) if compute_dtype is not None else jnp.dtype(x.dtype)

    Kp = _round_up(F, 16)   # bf16 sublane packing (also fine for f32)

    num_tc = _num_tensorcores()
    tile, Np = _pick_node_tile(
        N, Kp, G, dt.itemsize, out_dtype.itemsize,
        max_tile=max_node_tile, min_steps=4 * num_tc,
        vmem_budget=_vmem_budget(), x_buffers=x_buffers)

    # Layout plumbing: one fused cast+transpose+pad per array; no concatenate
    # pass over x (the esp term is added inside the kernel).
    xT = jnp.pad(x.T.astype(dt), ((0, Kp - F), (0, Np - N)))            # [Kp, Np]
    wT = jnp.pad(w.T.astype(dt), ((0, 0), (0, Kp - F)))                 # [G, Kp]
    espT = jnp.pad(esp.reshape(1, N).astype(jnp.float32),
                   ((0, 0), (0, Np - N)))                               # [1, Np]
    w_polT = w_pol.reshape(1, G).T.astype(jnp.float32)                  # [G, 1]

    oT = atomwise_linear_pol_lane_dense(
        wT, w_polT, xT, espT, node_tile=tile, out_dtype=out_dtype,
        x_buffers=x_buffers)                                            # [G, Np]
    return oT[:, :N].T                                                  # [N, G]


if __name__ == "__main__":
    # Small shapes consistent with the module: N atoms, node features "Fx0e",
    # output irreps "Gx0e", esp is one scalar ("0e") per atom.
    N, F, G = 64, 32, 16

    key = jax.random.PRNGKey(0)
    kx, kesp, kw, kwp = jax.random.split(key, 4)

    x = jax.random.normal(kx, (N, F), dtype=jnp.float32)       # data[field]
    esp = jax.random.normal(kesp, (N, 1), dtype=jnp.float32)   # data[ELEC_POTENTIAL_KEY]

    # e3nn o3.Linear weights ~ N(0,1); forward applies 1/sqrt(fan_in) path
    # normalization -- folded into the weight matrices here.
    w = jax.random.normal(kw, (F, G), dtype=jnp.float32) / math.sqrt(F)   # fan_in = F
    w_pol = jax.random.normal(kwp, (1, G), dtype=jnp.float32)             # fan_in = 1

    ref = x @ w + esp @ w_pol

    # Exact-precision path (f32 inputs, f32 accumulation): strict check.
    out_f32 = jax.block_until_ready(
        atomwise_linear_pol(x, esp, w, w_pol, compute_dtype=jnp.float32))
    assert out_f32.shape == (N, G)
    assert jnp.allclose(out_f32, ref, atol=1e-5, rtol=1e-5), "f32 mismatch vs reference"

    # Default path: bf16 x/w stream, f32 MXU accumulation, f32 esp term.
    out = jax.block_until_ready(atomwise_linear_pol(x, esp, w, w_pol))
    assert out.shape == (N, G) and out.dtype == x.dtype
    assert jnp.allclose(out, ref, atol=5e-2, rtol=5e-2), "bf16-input mismatch vs reference"

    # Ragged node count + multi-step grid (exercises padding & pipelining,
    # including the triple-buffered xT spec).
    N2 = 333
    k2x, k2e = jax.random.split(jax.random.PRNGKey(1), 2)
    x2 = jax.random.normal(k2x, (N2, F), dtype=jnp.float32)
    esp2 = jax.random.normal(k2e, (N2, 1), dtype=jnp.float32)
    out2 = jax.block_until_ready(
        atomwise_linear_pol(x2, esp2, w, w_pol, max_node_tile=128,
                            compute_dtype=jnp.float32))
    assert out2.shape == (N2, G)
    assert jnp.allclose(out2, x2 @ w + esp2 @ w_pol, atol=1e-5, rtol=1e-5), \
        "ragged-N mismatch vs reference"

    # Optional bf16 output stream (halves the write traffic in the
    # memory-bound regime); tolerance loosened only for rounding.
    out_bf16 = jax.block_until_ready(
        atomwise_linear_pol(x, esp, w, w_pol, out_dtype=jnp.bfloat16))
    assert out_bf16.dtype == jnp.bfloat16
    assert jnp.allclose(out_bf16.astype(jnp.float32), ref, atol=5e-2, rtol=5e-2), \
        "bf16-output mismatch vs reference"

    # TODO(synk): self.linear_esp and self.tensor_product_layer are created in
    # __init__ but never used in forward(); intentionally not implemented.

    print("KERNEL_OK")
</pallas_src>

<mosaic_0001>
module attributes {stable_mosaic.version = 11 : i64} {
  func.func @_linear_pol_kernel(%arg0: i32, %arg1: memref<16x32xf32, #tpu.memory_space<vmem>>, %arg2: memref<16x1xf32, #tpu.memory_space<vmem>>, %arg3: memref<32x128xf32, #tpu.memory_space<vmem>>, %arg4: memref<1x128xf32, #tpu.memory_space<vmem>>, %arg5: memref<16x128xf32, #tpu.memory_space<vmem>>) attributes {dimension_semantics = [#tpu.dimension_semantics<parallel>], iteration_bounds = array<i64: 1>, scalar_prefetch = 0 : i64, scratch_operands = 0 : i64, tpu.core_type = #tpu.core_type<tc>, window_params = [{pipeline_mode = #tpu.pipeline_mode<synchronous>, transform_indices = @transform_0, window_bounds = array<i64: 16, 32>}, {pipeline_mode = #tpu.pipeline_mode<synchronous>, transform_indices = @transform_1, window_bounds = array<i64: 16, 1>}, {transform_indices = @transform_2, window_bounds = array<i64: 32, 128>}, {transform_indices = @transform_3, window_bounds = array<i64: 1, 128>}, {transform_indices = @transform_4, window_bounds = array<i64: 16, 128>}]} {
    %c0 = arith.constant 0 : index
    %c0_0 = arith.constant 0 : index
    %0 = vector.load %arg1[%c0, %c0_0] : memref<16x32xf32, #tpu.memory_space<vmem>>, vector<16x32xf32>
    %c0_1 = arith.constant 0 : index
    %c0_2 = arith.constant 0 : index
    %1 = vector.load %arg3[%c0_1, %c0_2] : memref<32x128xf32, #tpu.memory_space<vmem>>, vector<32x128xf32>
    %cst = arith.constant dense<0.000000e+00> : vector<16x128xf32>
    %2 = tpu.matmul %0, %1, %cst {dimension_numbers = #tpu.dot_dimension_numbers<[1], [0], [0], [1], [0, 0, 1, 1], [], []>} : vector<16x32xf32>, vector<32x128xf32>, vector<16x128xf32> -> vector<16x128xf32>
    %c0_3 = arith.constant 0 : index
    %c0_4 = arith.constant 0 : index
    %3 = vector.load %arg2[%c0_3, %c0_4] : memref<16x1xf32, #tpu.memory_space<vmem>>, vector<16x1xf32>
    %c0_5 = arith.constant 0 : index
    %c0_6 = arith.constant 0 : index
    %4 = vector.load %arg4[%c0_5, %c0_6] : memref<1x128xf32, #tpu.memory_space<vmem>>, vector<1x128xf32>
    %5 = vector.broadcast %3 : vector<16x1xf32> to vector<16x128xf32>
    %6 = vector.broadcast %4 : vector<1x128xf32> to vector<16x128xf32>
    %7 = arith.mulf %5, %6 : vector<16x128xf32>
    %8 = arith.addf %2, %7 : vector<16x128xf32>
    %c0_7 = arith.constant 0 : index
    %c0_8 = arith.constant 0 : index
    %9 = vector.load %arg5[%c0_7, %c0_8] : memref<16x128xf32, #tpu.memory_space<vmem>>, vector<16x128xf32>
    tpu.vector_store %arg5[%c0_7, %c0_8], %8 {strides = array<i32>} : memref<16x128xf32, #tpu.memory_space<vmem>>, vector<16x128xf32>,
    return
  }
  func.func @transform_0(%arg0: i32) -> (i32, i32) {
    %c0_i32 = arith.constant 0 : i32
    %c0_i32_0 = arith.constant 0 : i32
    %c0_i32_1 = arith.constant 0 : i32
    return %c0_i32, %c0_i32_0 : i32, i32
  }
  func.func @transform_1(%arg0: i32) -> (i32, i32) {
    %c0_i32 = arith.constant 0 : i32
    %c0_i32_0 = arith.constant 0 : i32
    %c0_i32_1 = arith.constant 0 : i32
    return %c0_i32, %c0_i32_0 : i32, i32
  }
  func.func @transform_2(%arg0: i32) -> (i32, i32) {
    %c0_i32 = arith.constant 0 : i32
    %c0_i32_0 = arith.constant 0 : i32
    return %c0_i32, %arg0 : i32, i32
  }
  func.func @transform_3(%arg0: i32) -> (i32, i32) {
    %c0_i32 = arith.constant 0 : i32
    %c0_i32_0 = arith.constant 0 : i32
    return %c0_i32, %arg0 : i32, i32
  }
  func.func @transform_4(%arg0: i32) -> (i32, i32) {
    %c0_i32 = arith.constant 0 : i32
    %c0_i32_0 = arith.constant 0 : i32
    return %c0_i32, %arg0 : i32, i32
  }
}

</mosaic_0001>

<llo_original>
// kernel: tpu_custom_call.1
$region0: #{tpu_custom_call.1}
  #allocation0 [shape = 'u32[]', space=smem, size = 0x4, offset = 0x4, fixed_abs, tag = 'smem constant byte address 0x4 - core index']
  #allocation1 [shape = 'u32[144,128]{1,0:T(1,128)}', space=vmem, size = 0x12000, scoped, tag = 'internal scratch']
  %s0 = inlined_call_operand.vmem [shape: f32[16,32], index: 0, kind: input, shape index: {}]
  %s1 = inlined_call_operand.vmem [shape: f32[16,1], index: 1, kind: input, shape index: {}]
  %s2 = inlined_call_operand.hbm [shape: f32[32,128], index: 2, kind: input, shape index: {}]
  %s3 = inlined_call_operand.vmem [shape: f32[1,128], index: 3, kind: input, shape index: {}]
  %s4 = inlined_call_operand.hbm [shape: f32[16,128], index: 4, kind: output, shape index: {}]
  %s5 = sld [smem:[#allocation0]]
  $region30: #{tpu_custom_call.1} parent=0
    _
  %s7 = ssub.s32 1, %s5
  %s8 = scalar_select 0, %s7, %s5
  $region1: #{tpu_custom_call.1} parent=0
    #allocation2 [shape = 'u8[16384]{0}', space=vmem, size = 0x4000, scoped, tag = 'input window, operand 2, single buffered']
    #allocation3 [shape = 's32[1]{0}', space=sflag, size = 0x4, scoped, tag = 'scoped memory for tpu_custom_call.1']
    #allocation4 [shape = 's32[1]{0}', space=sflag, size = 0x4, scoped, tag = 'scoped memory for tpu_custom_call.1']
    #allocation5 [shape = 'u8[8192]{0}', space=vmem, size = 0x2000, scoped, tag = 'output window, operand 0, single buffered']
    %9 = vsyncpa [#allocation3], 0
    %10 = vsyncpa [#allocation4], 0
    // Predicated region
    $region2: #{tpu_custom_call.1} parent=1 // pred_check
      _
    $region3: #{tpu_custom_call.1} parent=1 // pred_check_branch
      %12 = sbr.rel (0) target = $region5
    $region4: #{tpu_custom_call.1} parent=1 // pred_region
      _
    $region5: #{tpu_custom_call.1} parent=1 // pred_fallthru
      _
    // Predicated region
    $region6: #{tpu_custom_call.1} parent=1 // pred_check
      _
    $region7: #{tpu_custom_call.1} parent=1 // pred_check_branch
      %14 = sbr.rel (0) target = $region9
    $region8: #{tpu_custom_call.1} parent=1 // pred_region
      _
    $region9: #{tpu_custom_call.1} parent=1 // pred_fallthru
      _
    // Predicated region
    $region10: #{tpu_custom_call.1} parent=1 // pred_check
      _
    $region11: #{tpu_custom_call.1} parent=1 // pred_check_branch
      %16 = sbr.rel (0) target = $region13
    $region12: #{tpu_custom_call.1} parent=1 // pred_region
      %s18 = ssub.s32 512, 512
      %19 = vsyncadd [#allocation3], %s18
      %s20 = sshll.u32 [#allocation2], 4
      %s21 = int_to_ptr.vmem [resolvable:$true] %s20
      %26 = dma.hbm_to_vmem [thread:$0]  %s2, 512, %s21, [#allocation3], 128, 128, 8
    $region13: #{tpu_custom_call.1} parent=1 // pred_fallthru
      _
    // Predicated region
    $region14: #{tpu_custom_call.1} parent=1 // pred_check
      _
    $region15: #{tpu_custom_call.1} parent=1 // pred_check_branch
      %28 = sbr.rel (0) target = $region17
    $region16: #{tpu_custom_call.1} parent=1 // pred_region
      _
    $region17: #{tpu_custom_call.1} parent=1 // pred_fallthru
      _
    // Predicated region
    $region18: #{tpu_custom_call.1} parent=1 // pred_check
      _
    $region19: #{tpu_custom_call.1} parent=1 // pred_check_branch
      %30 = sbr.rel (0) target = $region21
    $region20: #{tpu_custom_call.1} parent=1 // pred_region
      %31 = dma.done [#allocation3], 512
    $region21: #{tpu_custom_call.1} parent=1 // pred_fallthru
      _
    %v32 = vld [vmem:[%s0] sm:$0xff]
    %v33 = vld [vmem:[%s0 + $0x8] sm:$0xff]
    %v34 = vld [vmem:[#allocation2] sm:$0xff]
    %v35 = vld [vmem:[#allocation2 + $0x8] sm:$0xff]
    %v36 = vld [vmem:[#allocation2 + $0x10] sm:$0xff]
    %v37 = vld [vmem:[#allocation2 + $0x18] sm:$0xff]
    %v38 = vld [vmem:[%s1] sm:$0xff]
    %v39 = vld [vmem:[%s1 + $0x8] sm:$0xff]
    %v40 = vld [vmem:[%s3] sm:$0x1]
    %42 = vset.pattern.permute.xlu0 0
    %43 = vperm.xlu0 %42, %v38
    %v44 = vpop.permute.xlu0 %43
    %47 = vset.pattern.permute.xlu0 0
    %48 = vperm.xlu0 %47, %v39
    %v49 = vpop.permute.xlu0 %48
    %v52 = vlaneseq
    %v53 = vshrl.u32 %v52, 7
    %v54 = vsub.s32 0, %v53
    %v55 = vrot.slane %v40, %v54
    %v57 = vmul.f32 %v44, %v55
    %v58 = vmul.f32 %v49, %v55
    %vm59 = vcmask 261120
    %v61 = vsel %vm59, %v32, 0
    %v64 = vsel %vm59, %v33, 0
    %66 = vmatprep.subr.mxu0 0.0
    %67 = vmatpush1.msra.mxu0 %v34
    %68 = vmatprep.subr.mxu0 0.0
    %69 = vmatpush1.msra.mxu0 %v35
    %70 = vmatprep.subr.mxu0 0.0
    %71 = vmatpush1.msra.mxu0 %v36
    %72 = vmatprep.subr.mxu0 0.0
    %73 = vmatpush1.msra.mxu0 %v37
    %74 = vmatprep.subr.mxu0 0.0
    %75 = vmatpush1.msra.mxu0 0.0
    %76 = vmatprep.subr.mxu0 0.0
    %77 = vmatpush1.msra.mxu0 0.0
    %78 = vmatprep.subr.mxu0 0.0
    %79 = vmatpush1.msra.mxu0 0.0
    %80 = vmatprep.subr.mxu0 0.0
    %81 = vmatpush1.msra.mxu0 0.0
    %82 = vmatprep.subr.mxu0 0.0
    %83 = vmatpush1.msra.mxu0 0.0
    %84 = vmatprep.subr.mxu0 0.0
    %85 = vmatpush1.msra.mxu0 0.0
    %86 = vmatprep.subr.mxu0 0.0
    %87 = vmatpush1.msra.mxu0 0.0
    %88 = vmatprep.subr.mxu0 0.0
    %89 = vmatpush1.msra.mxu0 0.0
    %90 = vmatprep.subr.mxu0 0.0
    %91 = vmatpush1.msra.mxu0 0.0
    %92 = vmatprep.subr.mxu0 0.0
    %93 = vmatpush1.msra.mxu0 0.0
    %94 = vmatprep.subr.mxu0 0.0
    %95 = vmatpush1.msra.mxu0 0.0
    %96 = vmatprep.subr.mxu0 0.0
    %97 = vmatpush1.msra.mxu0 0.0
    %98 = vmatprep.subr.mxu0 0.0
    %99 = vmatpush1.msra.mxu0 0.0
    %100 = vmatprep.subr.mxu0 0.0
    %101 = vmatpush1.msra.mxu0 0.0
    %102 = vmatprep.subr.mxu0 0.0
    %103 = vmatpush1.msra.mxu0 0.0
    %104 = vmatprep.subr.mxu0 0.0
    %105 = vmatpush1.msra.mxu0 0.0
    %106 = vmatprep.subr.mxu0 0.0
    %107 = vmatpush1.msra.mxu0 0.0
    %108 = vmatprep.subr.mxu0 0.0
    %109 = vmatpush1.msra.mxu0 0.0
    %110 = vmatprep.subr.mxu0 0.0
    %111 = vmatpush1.msra.mxu0 0.0
    %112 = vmatprep.subr.mxu0 0.0
    %113 = vmatpush1.msra.mxu0 0.0
    %114 = vmatprep.subr.mxu0 0.0
    %115 = vmatpush1.msra.mxu0 0.0
    %116 = vmatprep.subr.mxu0 0.0
    %117 = vmatpush1.msra.mxu0 0.0
    %118 = vmatprep.subr.mxu0 0.0
    %119 = vmatpush1.msra.mxu0 0.0
    %120 = vmatprep.subr.mxu0 0.0
    %121 = vmatpush1.msra.mxu0 0.0
    %122 = vmatprep.subr.mxu0 0.0
    %123 = vmatpush1.msra.mxu0 0.0
    %124 = vmatprep.subr.mxu0 0.0
    %125 = vmatpush1.msra.mxu0 0.0
    %126 = vmatprep.subr.mxu0 0.0
    %127 = vmatpush1.msra.mxu0 0.0
    %128 = vmatprep.subr.mxu0 0.0
    %129 = vmatpush1.msra.mxu0 0.0
    %130 = vmatprep.mubr.f32.mxu0 0.0
    %131 = vmatmul.mubr.f32.gmra.mrb[0].mxu0 %v61
    %v132 = vpop.f32.mrb[0].mxu0
    %v133 = vadd.f32 %v57, %v132
    %v134 = vpop.f32.mrb[0].mxu0
    %135 = vmatprep.mubr.f32.mxu0 0.0
    %136 = vmatmul.mubr.f32.gmra.mrb[0].mxu0 %v64
    %v137 = vpop.f32.mrb[0].mxu0
    %v138 = vadd.f32 %v58, %v137
    %v139 = vpop.f32.mrb[0].mxu0
    %140 = vdwg.mxu0
    %141 = vst [vmem:[#allocation5] sm:$0xff] %v133
    %142 = vst [vmem:[#allocation5 + $0x8] sm:$0xff] %v138
    // Predicated region
    $region22: #{tpu_custom_call.1} parent=1 // pred_check
      _
    $region23: #{tpu_custom_call.1} parent=1 // pred_check_branch
      %144 = sbr.rel (0) target = $region25
    $region24: #{tpu_custom_call.1} parent=1 // pred_region
      %s146 = ssub.s32 256, 256
      %147 = vsyncadd [#allocation4], %s146
      %s148 = sshll.u32 [#allocation5], 4
      %s149 = int_to_ptr.vmem [resolvable:$true] %s148
      %154 = dma.vmem_to_hbm [thread:$0]  %s149, 256, %s4, [#allocation4], 128, 128, 8
    $region25: #{tpu_custom_call.1} parent=1 // pred_fallthru
      _
    // Predicated region
    $region26: #{tpu_custom_call.1} parent=1 // pred_check
      _
    $region27: #{tpu_custom_call.1} parent=1 // pred_check_branch
      %156 = sbr.rel (0) target = $region29
    $region28: #{tpu_custom_call.1} parent=1 // pred_region
      %157 = dma.done [#allocation4], 256
    $region29: #{tpu_custom_call.1} parent=1 // pred_fallthru
      _
    %158 = vsyncpa [#allocation3], 1
    %159 = vsyncpa [#allocation4], 1

</llo_original>
